<compile_context>
chip_gen: v7x
topology: tpu7x:2x2x1
jax: 0.10.0
libtpu: 0.0.40
codegen_flags: <defaults>
</compile_context>

<pallas_src>
import functools

import jax
import jax.numpy as jnp
from jax import lax
from jax.experimental import pallas as pl
from jax.experimental.pallas import tpu as pltpu


_LANE = 128
_SUBLANE = 8


# ----------------------------- kernels -------------------------------------


def _norm_kernel(x_ref, w_ref, b_ref, y_ref, mean_ref, std_ref, *,
                 eps, affine, reduce_axis):
    """RevIN 'norm': per-(batch,channel) stats over the time axis, then a
    single FMA per element: y = x*scale + shift."""
    chan_axis = 2 if reduce_axis == 1 else 1
    x = x_ref[...].astype(jnp.float32)
    inv_t = 1.0 / x.shape[reduce_axis]
    # One pass: E[x], E[x^2] in f32 (avoids a full (BB,T,C) `centered` temp).
    s1 = jnp.sum(x, axis=reduce_axis, keepdims=True)
    s2 = jnp.sum(x * x, axis=reduce_axis, keepdims=True)
    mean = s1 * inv_t
    var = jnp.maximum(s2 * inv_t - mean * mean, 0.0)     # unbiased=False
    std = jnp.sqrt(var + eps)
    inv_std = lax.rsqrt(var + eps)                       # EUP, off the VALU path
    if affine:
        bshape = [1, 1, 1]
        bshape[chan_axis] = -1
        w = w_ref[...].astype(jnp.float32).reshape(bshape)
        b = b_ref[...].astype(jnp.float32).reshape(bshape)
        scale = inv_std * w
        shift = b - mean * scale
    else:
        scale = inv_std
        shift = -mean * scale
    y_ref[...] = (x * scale + shift).astype(y_ref.dtype)
    mean_ref[...] = mean.astype(mean_ref.dtype)
    std_ref[...] = std.astype(std_ref.dtype)


def _denorm_kernel(x_ref, mean_ref, std_ref, w_ref, b_ref, y_ref, *,
                   eps, affine, chan_axis):
    """RevIN 'denorm': scale/shift folded per (batch, channel) so the big
    elementwise path is one FMA: y = x*scale + shift."""
    x = x_ref[...].astype(jnp.float32)
    std = std_ref[...].astype(jnp.float32)
    mean = mean_ref[...].astype(jnp.float32)
    if affine:
        bshape = [1, 1, 1]
        bshape[chan_axis] = -1
        w = w_ref[...].astype(jnp.float32).reshape(bshape)
        b = b_ref[...].astype(jnp.float32).reshape(bshape)
        # O(C) work per step; exact reciprocal keeps agreement with the
        # reference divide (approx=True would also be acceptable here).
        inv_w = pl.reciprocal(w + eps * eps, approx=False)
        scale = std * inv_w
        shift = mean - b * scale
    else:
        scale = std
        shift = mean
    y_ref[...] = (x * scale + shift).astype(y_ref.dtype)


# ----------------------------- sizing helpers --------------------------------


def _round_up(n, m):
    return -(-n // m) * m


def _divisors(n):
    out = set()
    d = 1
    while d * d <= n:
        if n % d == 0:
            out.add(d)
            out.add(n // d)
        d += 1
    return sorted(out)


def _tpu_vmem_and_cores():
    """(physical VMEM bytes, TensorCores per device) — best effort."""
    vmem = 64 * 1024 * 1024          # conservative default (v7x physical)
    cores = 1
    try:
        info = pltpu.get_tpu_info()
        for name in ("vmem_capacity_bytes", "vmem_bytes", "vmem_size_bytes"):
            v = getattr(info, name, None)
            if isinstance(v, int) and v > 0:
                vmem = v
                break
        for name in ("num_cores", "core_count", "tensorcore_count",
                     "num_tensorcores"):
            v = getattr(info, name, None)
            if isinstance(v, int) and v > 0:
                cores = v
                break
    except Exception:
        pass
    return vmem, cores


def _budgets():
    """(per-step block budget, vmem_limit_bytes, num_cores), per generation.
    v7x has 64 MiB physical VMEM vs 128 MiB on v5e/v6e, so derive from the
    reported capacity instead of reusing one fixed number."""
    cap, cores = _tpu_vmem_and_cores()
    budget = min(int(cap * 0.6), 48 * 1024 * 1024)
    vmem_limit = int(min(cap * 0.85, budget + 16 * 1024 * 1024))
    return budget, vmem_limit, cores


def _lane_util(n):
    return n / _round_up(n, _LANE)


def _choose_layout(T, C):
    # 'btc' keeps channels on lanes (no transpose); 'bct' puts time on lanes.
    # Pick whichever gives denser vregs / unmasked stores; ties go to 'btc'
    # to avoid the wrapper-side transpose.
    return "bct" if _lane_util(T) > _lane_util(C) else "btc"


def _padded_block_elems(layout, bb, tt, C):
    if layout == "btc":               # block (bb, tt, C): sublanes=tt, lanes=C
        return bb * _round_up(tt, _SUBLANE) * _round_up(C, _LANE)
    else:                             # block (bb, C, tt): sublanes=C, lanes=tt
        return bb * _round_up(C, _SUBLANE) * _round_up(tt, _LANE)


def _pick_batch_block(B, per_batch_bytes, budget_bytes, num_cores):
    """Largest divisor BB of B whose block fits the budget; only when the part
    has more than one TensorCore keep the grid extent a multiple of the core
    count (megacore balance)."""
    best = 1
    for bb in _divisors(B):
        if bb * per_batch_bytes > budget_bytes:
            continue
        if num_cores > 1 and B >= num_cores and (B // bb) % num_cores != 0:
            continue
        best = max(best, bb)
    return best


# ----------------------------- wrapper --------------------------------------


class NormalizePallas:
    """JAX/Pallas port of the PyTorch `Normalize` (RevIN) module."""

    def __init__(self, num_features: int, eps: float = 1e-5, affine: bool = False,
                 subtract_last: bool = False, non_norm: bool = False):
        if subtract_last or non_norm:
            # TODO(synk): subtract_last / non_norm variants not implemented.
            raise NotImplementedError("subtract_last / non_norm not implemented")
        self.num_features = num_features
        self.eps = float(eps)
        self.affine = affine
        self.affine_weight = jnp.ones((1, num_features), jnp.float32)
        self.affine_bias = jnp.zeros((1, num_features), jnp.float32)
        # TODO(synk): Python-side stat state mirrors the PyTorch module but does
        # not compose with jit/vmap; a functional API would return/accept stats.
        self.mean = None     # (B, 1, C) f32
        self.stdev = None    # (B, 1, C) f32

    # ---- mode == 'norm' ----
    def norm(self, x):
        B, T, C = x.shape
        assert C == self.num_features
        budget, vmem_limit, cores = _budgets()
        layout = _choose_layout(T, C)

        el = jnp.dtype(x.dtype).itemsize
        # double-buffered input + output + ~3 f32 temps (x upcast, x*x, y)
        bytes_per_elem = 2 * el + 2 * el + 12
        per_batch = _padded_block_elems(layout, 1, T, C) * bytes_per_elem
        if per_batch > vmem_limit:
            # TODO(synk): two-pass T-axis accumulation (sum/sumsq scratch with
            # pl.when init/finalize) for (T, C) slabs that exceed VMEM.
            raise NotImplementedError(
                "single-batch (T, C) block exceeds the VMEM limit")
        BB = _pick_batch_block(B, per_batch, budget, cores)

        if layout == "btc":
            x_in = x
            xspec = pl.BlockSpec((BB, T, C), lambda i: (i, 0, 0))
            sspec = pl.BlockSpec((BB, 1, C), lambda i: (i, 0, 0))
            stat_shape = (B, 1, C)
            w, b = self.affine_weight, self.affine_bias
            wspec = pl.BlockSpec((1, C), lambda i: (0, 0))
            reduce_axis = 1
        else:
            x_in = jnp.transpose(x, (0, 2, 1))            # (B, C, T): lane-dense
            xspec = pl.BlockSpec((BB, C, T), lambda i: (i, 0, 0))
            sspec = pl.BlockSpec((BB, C, 1), lambda i: (i, 0, 0))
            stat_shape = (B, C, 1)
            w = self.affine_weight.reshape(C, 1)
            b = self.affine_bias.reshape(C, 1)
            wspec = pl.BlockSpec((C, 1), lambda i: (0, 0))
            reduce_axis = 2

        kernel = functools.partial(_norm_kernel, eps=self.eps,
                                   affine=self.affine, reduce_axis=reduce_axis)
        y, mean, std = pl.pallas_call(
            kernel,
            out_shape=(
                jax.ShapeDtypeStruct(x_in.shape, x.dtype),
                jax.ShapeDtypeStruct(stat_shape, jnp.float32),
                jax.ShapeDtypeStruct(stat_shape, jnp.float32),
            ),
            grid_spec=pltpu.PrefetchScalarGridSpec(
                num_scalar_prefetch=0,
                grid=(B // BB,),
                in_specs=[xspec, wspec, wspec],
                out_specs=[xspec, sspec, sspec],
            ),
            compiler_params=pltpu.CompilerParams(
                dimension_semantics=("parallel",),
                vmem_limit_bytes=vmem_limit),
        )(x_in, w, b)

        if layout == "bct":
            y = jnp.transpose(y, (0, 2, 1))
        # canonical (B, 1, C) stats regardless of in-kernel layout
        self.mean = mean.reshape(B, 1, C)
        self.stdev = std.reshape(B, 1, C)
        return y

    # ---- mode == 'denorm' ----
    def denorm(self, x):
        assert self.mean is not None and self.stdev is not None, "call norm first"
        B, T, C = x.shape
        assert C == self.num_features
        budget, vmem_limit, cores = _budgets()
        layout = _choose_layout(T, C)

        el = jnp.dtype(x.dtype).itemsize
        bytes_per_elem = 2 * el + 2 * el + 8   # dbl-buffered in/out + f32 temps

        def block_bytes(bb, tt):
            return _padded_block_elems(layout, bb, tt, C) * bytes_per_elem

        if block_bytes(1, T) <= budget:
            BB = _pick_batch_block(B, block_bytes(1, T), budget, cores)
            TT = T
        else:
            # One batch at a time; tile the (reduction-free) time axis.
            BB = 1
            min_mult = _SUBLANE if layout == "btc" else _LANE
            cands = [d for d in _divisors(T)
                     if d % min_mult == 0 and block_bytes(1, d) <= budget]
            TT = max(cands) if cands else T

        if layout == "btc":
            x_in = x
            xspec = pl.BlockSpec((BB, TT, C), lambda i, j: (i, j, 0))
            sspec = pl.BlockSpec((BB, 1, C), lambda i, j: (i, 0, 0))
            stats = (self.mean, self.stdev)
            w, b = self.affine_weight, self.affine_bias
            wspec = pl.BlockSpec((1, C), lambda i, j: (0, 0))
            chan_axis = 2
        else:
            x_in = jnp.transpose(x, (0, 2, 1))            # (B, C, T)
            xspec = pl.BlockSpec((BB, C, TT), lambda i, j: (i, 0, j))
            sspec = pl.BlockSpec((BB, C, 1), lambda i, j: (i, 0, 0))
            stats = (self.mean.reshape(B, C, 1), self.stdev.reshape(B, C, 1))
            w = self.affine_weight.reshape(C, 1)
            b = self.affine_bias.reshape(C, 1)
            wspec = pl.BlockSpec((C, 1), lambda i, j: (0, 0))
            chan_axis = 1

        kernel = functools.partial(_denorm_kernel, eps=self.eps,
                                   affine=self.affine, chan_axis=chan_axis)
        y = pl.pallas_call(
            kernel,
            out_shape=jax.ShapeDtypeStruct(x_in.shape, x.dtype),
            grid_spec=pltpu.PrefetchScalarGridSpec(
                num_scalar_prefetch=0,
                grid=(B // BB, T // TT),
                in_specs=[xspec, sspec, sspec, wspec, wspec],
                out_specs=xspec,
            ),
            compiler_params=pltpu.CompilerParams(
                dimension_semantics=("parallel", "parallel"),
                vmem_limit_bytes=vmem_limit),
        )(x_in, *stats, w, b)

        if layout == "bct":
            y = jnp.transpose(y, (0, 2, 1))
        return y

    def __call__(self, x, mode):
        if mode == "norm":
            return self.norm(x)
        if mode == "denorm":
            return self.denorm(x)
        raise NotImplementedError(f"Mode '{mode}' is not implemented.")


# ----------------------------- reference & test ------------------------------


def _ref_norm(x, eps, w, b, affine):
    mean = jnp.mean(x, axis=1, keepdims=True)
    var = jnp.mean((x - mean) ** 2, axis=1, keepdims=True)
    std = jnp.sqrt(var + eps)
    y = (x - mean) / std
    if affine:
        y = y * w.reshape(1, 1, -1) + b.reshape(1, 1, -1)
    return y, mean, std


def _ref_denorm(x, mean, std, eps, w, b, affine):
    if affine:
        x = (x - b.reshape(1, 1, -1)) / (w.reshape(1, 1, -1) + eps * eps)
    return x * std + mean


if __name__ == "__main__":
    key = jax.random.PRNGKey(0)
    # Second case has T a multiple of 128 so the lane-dense (B, C, T) path runs.
    for case, (B, T, C) in enumerate(((2, 8, 16), (2, 128, 12))):
        x = (jax.random.normal(jax.random.fold_in(key, case), (B, T, C),
                               jnp.float32) * 3.0 + 1.5)
        for affine in (False, True):
            mod = NormalizePallas(num_features=C, eps=1e-5, affine=affine)

            y = mod(x, "norm")
            jax.block_until_ready(y)
            y_ref, mean_ref, std_ref = _ref_norm(x, mod.eps, mod.affine_weight,
                                                 mod.affine_bias, affine)
            assert jnp.allclose(y, y_ref, atol=1e-4, rtol=1e-4), "norm mismatch"
            assert jnp.allclose(mod.mean, mean_ref, atol=1e-4, rtol=1e-4)
            assert jnp.allclose(mod.stdev, std_ref, atol=1e-4, rtol=1e-4)

            x_back = mod(y, "denorm")
            jax.block_until_ready(x_back)
            x_back_ref = _ref_denorm(y, mod.mean, mod.stdev, mod.eps,
                                     mod.affine_weight, mod.affine_bias, affine)
            assert jnp.allclose(x_back, x_back_ref, atol=1e-4, rtol=1e-4), \
                "denorm mismatch"
            # round-trip should recover the original input
            assert jnp.allclose(x_back, x, atol=1e-3, rtol=1e-3), \
                "round-trip mismatch"

    print("KERNEL_OK")
</pallas_src>

<mosaic_0001>
module attributes {stable_mosaic.version = 11 : i64} {
  func.func @_norm_kernel(%arg0: i32, %arg1: memref<2x8x16xf32, #tpu.memory_space<vmem>>, %arg2: memref<1x16xf32, #tpu.memory_space<vmem>>, %arg3: memref<1x16xf32, #tpu.memory_space<vmem>>, %arg4: memref<2x8x16xf32, #tpu.memory_space<vmem>>, %arg5: memref<2x1x16xf32, #tpu.memory_space<vmem>>, %arg6: memref<2x1x16xf32, #tpu.memory_space<vmem>>) attributes {dimension_semantics = [#tpu.dimension_semantics<parallel>], iteration_bounds = array<i64: 1>, scalar_prefetch = 0 : i64, scratch_operands = 0 : i64, tpu.core_type = #tpu.core_type<tc>, window_params = [{transform_indices = @transform_0, window_bounds = array<i64: 2, 8, 16>}, {pipeline_mode = #tpu.pipeline_mode<synchronous>, transform_indices = @transform_1, window_bounds = array<i64: 1, 16>}, {pipeline_mode = #tpu.pipeline_mode<synchronous>, transform_indices = @transform_2, window_bounds = array<i64: 1, 16>}, {transform_indices = @transform_3, window_bounds = array<i64: 2, 8, 16>}, {transform_indices = @transform_4, window_bounds = array<i64: 2, 1, 16>}, {transform_indices = @transform_5, window_bounds = array<i64: 2, 1, 16>}]} {
    %c0 = arith.constant 0 : index
    %c0_0 = arith.constant 0 : index
    %c0_1 = arith.constant 0 : index
    %0 = vector.load %arg1[%c0, %c0_0, %c0_1] : memref<2x8x16xf32, #tpu.memory_space<vmem>>, vector<2x8x16xf32>
    %cst = arith.constant dense<0.000000e+00> : vector<2x16xf32>
    %1 = vector.multi_reduction <add>, %0, %cst [1] : vector<2x8x16xf32> to vector<2x16xf32>
    %2 = vector.shape_cast %1 : vector<2x16xf32> to vector<2x1x16xf32>
    %3 = arith.mulf %0, %0 : vector<2x8x16xf32>
    %cst_2 = arith.constant dense<0.000000e+00> : vector<2x16xf32>
    %4 = vector.multi_reduction <add>, %3, %cst_2 [1] : vector<2x8x16xf32> to vector<2x16xf32>
    %5 = vector.shape_cast %4 : vector<2x16xf32> to vector<2x1x16xf32>
    %cst_3 = arith.constant 1.250000e-01 : f32
    %6 = vector.broadcast %cst_3 : f32 to vector<2x1x16xf32>
    %7 = arith.mulf %2, %6 : vector<2x1x16xf32>
    %cst_4 = arith.constant 1.250000e-01 : f32
    %8 = vector.broadcast %cst_4 : f32 to vector<2x1x16xf32>
    %9 = arith.mulf %5, %8 : vector<2x1x16xf32>
    %10 = arith.mulf %7, %7 : vector<2x1x16xf32>
    %11 = arith.subf %9, %10 : vector<2x1x16xf32>
    %cst_5 = arith.constant 0.000000e+00 : f32
    %12 = vector.broadcast %cst_5 : f32 to vector<2x1x16xf32>
    %13 = arith.maximumf %11, %12 : vector<2x1x16xf32>
    %cst_6 = arith.constant 9.99999974E-6 : f32
    %14 = vector.broadcast %cst_6 : f32 to vector<2x1x16xf32>
    %15 = arith.addf %13, %14 : vector<2x1x16xf32>
    %16 = math.sqrt %15 : vector<2x1x16xf32>
    %cst_7 = arith.constant 9.99999974E-6 : f32
    %17 = vector.broadcast %cst_7 : f32 to vector<2x1x16xf32>
    %18 = arith.addf %13, %17 : vector<2x1x16xf32>
    %19 = math.rsqrt %18 : vector<2x1x16xf32>
    %cst_8 = arith.constant 0.000000e+00 : f32
    %20 = vector.broadcast %cst_8 : f32 to vector<2x1x16xf32>
    %21 = arith.subf %20, %7 : vector<2x1x16xf32>
    %22 = arith.mulf %21, %19 : vector<2x1x16xf32>
    %23 = vector.broadcast %19 : vector<2x1x16xf32> to vector<2x8x16xf32>
    %24 = arith.mulf %0, %23 : vector<2x8x16xf32>
    %25 = vector.broadcast %22 : vector<2x1x16xf32> to vector<2x8x16xf32>
    %26 = arith.addf %24, %25 : vector<2x8x16xf32>
    %c0_9 = arith.constant 0 : index
    %c0_10 = arith.constant 0 : index
    %c0_11 = arith.constant 0 : index
    %27 = vector.load %arg4[%c0_9, %c0_10, %c0_11] : memref<2x8x16xf32, #tpu.memory_space<vmem>>, vector<2x8x16xf32>
    tpu.vector_store %arg4[%c0_9, %c0_10, %c0_11], %26 {strides = array<i32>} : memref<2x8x16xf32, #tpu.memory_space<vmem>>, vector<2x8x16xf32>,
    %c0_12 = arith.constant 0 : index
    %c0_13 = arith.constant 0 : index
    %c0_14 = arith.constant 0 : index
    %28 = vector.load %arg5[%c0_12, %c0_13, %c0_14] : memref<2x1x16xf32, #tpu.memory_space<vmem>>, vector<2x1x16xf32>
    tpu.vector_store %arg5[%c0_12, %c0_13, %c0_14], %7 {strides = array<i32>} : memref<2x1x16xf32, #tpu.memory_space<vmem>>, vector<2x1x16xf32>,
    %c0_15 = arith.constant 0 : index
    %c0_16 = arith.constant 0 : index
    %c0_17 = arith.constant 0 : index
    %29 = vector.load %arg6[%c0_15, %c0_16, %c0_17] : memref<2x1x16xf32, #tpu.memory_space<vmem>>, vector<2x1x16xf32>
    tpu.vector_store %arg6[%c0_15, %c0_16, %c0_17], %16 {strides = array<i32>} : memref<2x1x16xf32, #tpu.memory_space<vmem>>, vector<2x1x16xf32>,
    return
  }
  func.func @transform_0(%arg0: i32) -> (i32, i32, i32) {
    %c0_i32 = arith.constant 0 : i32
    %c0_i32_0 = arith.constant 0 : i32
    %c0_i32_1 = arith.constant 0 : i32
    return %arg0, %c0_i32, %c0_i32_0 : i32, i32, i32
  }
  func.func @transform_1(%arg0: i32) -> (i32, i32) {
    %c0_i32 = arith.constant 0 : i32
    %c0_i32_0 = arith.constant 0 : i32
    %c0_i32_1 = arith.constant 0 : i32
    return %c0_i32, %c0_i32_0 : i32, i32
  }
  func.func @transform_2(%arg0: i32) -> (i32, i32) {
    %c0_i32 = arith.constant 0 : i32
    %c0_i32_0 = arith.constant 0 : i32
    %c0_i32_1 = arith.constant 0 : i32
    return %c0_i32, %c0_i32_0 : i32, i32
  }
  func.func @transform_3(%arg0: i32) -> (i32, i32, i32) {
    %c0_i32 = arith.constant 0 : i32
    %c0_i32_0 = arith.constant 0 : i32
    %c0_i32_1 = arith.constant 0 : i32
    return %arg0, %c0_i32, %c0_i32_0 : i32, i32, i32
  }
  func.func @transform_4(%arg0: i32) -> (i32, i32, i32) {
    %c0_i32 = arith.constant 0 : i32
    %c0_i32_0 = arith.constant 0 : i32
    %c0_i32_1 = arith.constant 0 : i32
    return %arg0, %c0_i32, %c0_i32_0 : i32, i32, i32
  }
  func.func @transform_5(%arg0: i32) -> (i32, i32, i32) {
    %c0_i32 = arith.constant 0 : i32
    %c0_i32_0 = arith.constant 0 : i32
    %c0_i32_1 = arith.constant 0 : i32
    return %arg0, %c0_i32, %c0_i32_0 : i32, i32, i32
  }
}

</mosaic_0001>

<llo_original>
// kernel: tpu_custom_call.1
$region0: #{tpu_custom_call.1}
  #allocation0 [shape = 'u32[]', space=smem, size = 0x4, offset = 0x4, fixed_abs, tag = 'smem constant byte address 0x4 - core index']
  #allocation1 [shape = 'u32[144,128]{1,0:T(1,128)}', space=vmem, size = 0x12000, scoped, tag = 'internal scratch']
  %s0 = inlined_call_operand.hbm [shape: f32[2,8,16], index: 0, kind: input, shape index: {}]
  %s1 = inlined_call_operand.vmem [shape: f32[1,16], index: 1, kind: input, shape index: {}]
  %s2 = inlined_call_operand.vmem [shape: f32[1,16], index: 2, kind: input, shape index: {}]
  %s3 = inlined_call_operand.hbm [shape: f32[2,8,16], index: 3, kind: output, shape index: {0}]
  %s4 = inlined_call_operand.hbm [shape: f32[2,1,16], index: 4, kind: output, shape index: {1}]
  %s5 = inlined_call_operand.hbm [shape: f32[2,1,16], index: 5, kind: output, shape index: {2}]
  %6 = xla_tuple %s3, %s4, %s5
  %s7 = sld [smem:[#allocation0]]
  $region42: #{tpu_custom_call.1} parent=0
    _
  %s9 = ssub.s32 1, %s7
  %s10 = scalar_select 0, %s9, %s7
  $region1: #{tpu_custom_call.1} parent=0
    #allocation2 [shape = 'u8[8192]{0}', space=vmem, size = 0x2000, scoped, tag = 'input window, operand 0, single buffered']
    #allocation3 [shape = 's32[1]{0}', space=sflag, size = 0x4, scoped, tag = 'scoped memory for tpu_custom_call.1']
    #allocation4 [shape = 's32[1]{0}', space=sflag, size = 0x4, scoped, tag = 'scoped memory for tpu_custom_call.1']
    #allocation5 [shape = 'u8[8192]{0}', space=vmem, size = 0x2000, scoped, tag = 'output window, operand 0, single buffered']
    #allocation6 [shape = 'u8[1024]{0}', space=vmem, size = 0x400, scoped, tag = 'output window, operand 1, single buffered']
    #allocation7 [shape = 's32[1]{0}', space=sflag, size = 0x4, scoped, tag = 'scoped memory for tpu_custom_call.1']
    #allocation8 [shape = 'u8[1024]{0}', space=vmem, size = 0x400, scoped, tag = 'output window, operand 2, single buffered']
    %11 = vsyncpa [#allocation3], 0
    %12 = vsyncpa [#allocation4], 0
    %13 = vsyncpa [#allocation7], 0
    // Predicated region
    $region2: #{tpu_custom_call.1} parent=1 // pred_check
      _
    $region3: #{tpu_custom_call.1} parent=1 // pred_check_branch
      %15 = sbr.rel (0) target = $region5
    $region4: #{tpu_custom_call.1} parent=1 // pred_region
      %s17 = ssub.s32 256, 256
      %18 = vsyncadd [#allocation3], %s17
      %s19 = sshll.u32 [#allocation2], 4
      %s20 = int_to_ptr.vmem [resolvable:$true] %s19
      %25 = dma.hbm_to_vmem [thread:$0]  %s0, 256, %s20, [#allocation3], 128, 128, 8
    $region5: #{tpu_custom_call.1} parent=1 // pred_fallthru
      _
    // Predicated region
    $region6: #{tpu_custom_call.1} parent=1 // pred_check
      _
    $region7: #{tpu_custom_call.1} parent=1 // pred_check_branch
      %27 = sbr.rel (0) target = $region9
    $region8: #{tpu_custom_call.1} parent=1 // pred_region
      _
    $region9: #{tpu_custom_call.1} parent=1 // pred_fallthru
      _
    // Predicated region
    $region10: #{tpu_custom_call.1} parent=1 // pred_check
      _
    $region11: #{tpu_custom_call.1} parent=1 // pred_check_branch
      %29 = sbr.rel (0) target = $region13
    $region12: #{tpu_custom_call.1} parent=1 // pred_region
      _
    $region13: #{tpu_custom_call.1} parent=1 // pred_fallthru
      _
    // Predicated region
    $region14: #{tpu_custom_call.1} parent=1 // pred_check
      _
    $region15: #{tpu_custom_call.1} parent=1 // pred_check_branch
      %31 = sbr.rel (0) target = $region17
    $region16: #{tpu_custom_call.1} parent=1 // pred_region
      %32 = dma.done [#allocation3], 256
    $region17: #{tpu_custom_call.1} parent=1 // pred_fallthru
      _
    %v33 = vld [vmem:[#allocation2] sm:$0xff]
    %v34 = vld [vmem:[#allocation2 + $0x8] sm:$0xff]
    %vm35 = vcmask 130048
    %v36 = vsel %vm35, %v33, 0.0
    %v37 = vrot.slane %v36, 4
    %v38 = vadd.f32 %v36, %v37
    %v39 = vrot.slane %v38, 2
    %v40 = vadd.f32 %v38, %v39
    %v41 = vrot.slane %v40, 1
    %v42 = vadd.f32 %v40, %v41
    %v43 = vsel %vm35, %v34, 0.0
    %v44 = vrot.slane %v43, 4
    %v45 = vadd.f32 %v43, %v44
    %v46 = vrot.slane %v45, 2
    %v47 = vadd.f32 %v45, %v46
    %v48 = vrot.slane %v47, 1
    %v49 = vadd.f32 %v47, %v48
    %v50 = vmul.f32 %v33, %v33
    %v51 = vmul.f32 %v34, %v34
    %v52 = vsel %vm35, %v50, 0.0
    %v53 = vrot.slane %v52, 4
    %v54 = vadd.f32 %v52, %v53
    %v55 = vrot.slane %v54, 2
    %v56 = vadd.f32 %v54, %v55
    %v57 = vrot.slane %v56, 1
    %v58 = vadd.f32 %v56, %v57
    %v59 = vsel %vm35, %v51, 0.0
    %v60 = vrot.slane %v59, 4
    %v61 = vadd.f32 %v59, %v60
    %v62 = vrot.slane %v61, 2
    %v63 = vadd.f32 %v61, %v62
    %v64 = vrot.slane %v63, 1
    %v65 = vadd.f32 %v63, %v64
    %v66 = vmul.f32 %v42, 0.125
    %v67 = vmul.f32 %v49, 0.125
    %v68 = vmul.f32 %v58, 0.125
    %v69 = vmul.f32 %v65, 0.125
    %v70 = vmul.f32 %v66, %v66
    %v71 = vmul.f32 %v67, %v67
    %v72 = vsub.f32 %v68, %v70
    %v73 = vsub.f32 %v69, %v71
    %v74 = vmax.f32 %v72, 0.0
    %v75 = vmax.f32 %v73, 0.0
    %v76 = vadd.f32 %v74, 1e-05
    %v77 = vadd.f32 %v75, 1e-05
    %v78 = vrsqrt.pop %v76
    %v79 = vmul.f32 %v76, %v78
    %vm80 = vcmp.eq.f32.partialorder %v76, inf
    %v81 = vsel %vm80, %v76, %v79
    %vm82 = vcmp.eq.f32.partialorder %v76, 0.0
    %v83 = vand.u32 %v76, 2147483648
    %v84 = vsel %vm82, %v83, %v81
    %v85 = vrsqrt.pop %v77
    %v86 = vmul.f32 %v77, %v85
    %vm87 = vcmp.eq.f32.partialorder %v77, inf
    %v88 = vsel %vm87, %v77, %v86
    %vm89 = vcmp.eq.f32.partialorder %v77, 0.0
    %v90 = vand.u32 %v77, 2147483648
    %v91 = vsel %vm89, %v90, %v88
    %v92 = vrsqrt.pop %v76
    %v93 = vrsqrt.pop %v77
    %v94 = vsub.f32 0.0, %v66
    %v95 = vsub.f32 0.0, %v67
    %v96 = vmul.f32 %v94, %v92
    %v97 = vmul.f32 %v95, %v93
    %v98 = vmul.f32 %v33, %v92
    %v99 = vmul.f32 %v34, %v93
    %v100 = vadd.f32 %v98, %v96
    %v101 = vadd.f32 %v99, %v97
    %102 = vst.msk [vmem:[#allocation5] sm:$0xff] %vm35, %v100
    %103 = vst.msk [vmem:[#allocation5 + $0x8] sm:$0xff] %vm35, %v101
    %vm104 = vcmask 122880
    %105 = vst.msk [vmem:[#allocation6] sm:$0x1] %vm104, %v66
    %106 = vst.msk [vmem:[#allocation6 + $0x1] sm:$0x1] %vm104, %v67
    %107 = vst.msk [vmem:[#allocation8] sm:$0x1] %vm104, %v84
    %108 = vst.msk [vmem:[#allocation8 + $0x1] sm:$0x1] %vm104, %v91
    // Predicated region
    $region18: #{tpu_custom_call.1} parent=1 // pred_check
      _
    $region19: #{tpu_custom_call.1} parent=1 // pred_check_branch
      %110 = sbr.rel (0) target = $region21
    $region20: #{tpu_custom_call.1} parent=1 // pred_region
      %s112 = ssub.s32 256, 256
      %113 = vsyncadd [#allocation4], %s112
      %s114 = sshll.u32 [#allocation5], 4
      %s115 = int_to_ptr.vmem [resolvable:$true] %s114
      %120 = dma.vmem_to_hbm [thread:$0]  %s115, 256, %s3, [#allocation4], 128, 128, 8
    $region21: #{tpu_custom_call.1} parent=1 // pred_fallthru
      _
    // Predicated region
    $region22: #{tpu_custom_call.1} parent=1 // pred_check
      _
    $region23: #{tpu_custom_call.1} parent=1 // pred_check_branch
      %122 = sbr.rel (0) target = $region25
    $region24: #{tpu_custom_call.1} parent=1 // pred_region
      %s124 = ssub.s32 32, 32
      %125 = vsyncadd [#allocation7], %s124
      %s126 = sshll.u32 [#allocation6], 4
      %s127 = int_to_ptr.vmem [resolvable:$true] %s126
      %132 = dma.vmem_to_hbm [thread:$0]  %s127, 32, %s4, [#allocation7], 16, 16, 1
    $region25: #{tpu_custom_call.1} parent=1 // pred_fallthru
      _
    // Predicated region
    $region26: #{tpu_custom_call.1} parent=1 // pred_check
      _
    $region27: #{tpu_custom_call.1} parent=1 // pred_check_branch
      %134 = sbr.rel (0) target = $region29
    $region28: #{tpu_custom_call.1} parent=1 // pred_region
      %s136 = ssub.s32 32, 32
      %137 = vsyncadd [#allocation7], %s136
      %s138 = sshll.u32 [#allocation8], 4
      %s139 = int_to_ptr.vmem [resolvable:$true] %s138
      %144 = dma.vmem_to_hbm [thread:$0]  %s139, 32, %s5, [#allocation7], 16, 16, 1
    $region29: #{tpu_custom_call.1} parent=1 // pred_fallthru
      _
    // Predicated region
    $region30: #{tpu_custom_call.1} parent=1 // pred_check
      _
    $region31: #{tpu_custom_call.1} parent=1 // pred_check_branch
      %146 = sbr.rel (0) target = $region33
    $region32: #{tpu_custom_call.1} parent=1 // pred_region
      %147 = dma.done [#allocation4], 256
    $region33: #{tpu_custom_call.1} parent=1 // pred_fallthru
      _
    // Predicated region
    $region34: #{tpu_custom_call.1} parent=1 // pred_check
      _
    $region35: #{tpu_custom_call.1} parent=1 // pred_check_branch
      %149 = sbr.rel (0) target = $region37
    $region36: #{tpu_custom_call.1} parent=1 // pred_region
      %150 = dma.done [#allocation7], 32
    $region37: #{tpu_custom_call.1} parent=1 // pred_fallthru
      _
    // Predicated region
    $region38: #{tpu_custom_call.1} parent=1 // pred_check
      _
    $region39: #{tpu_custom_call.1} parent=1 // pred_check_branch
      %152 = sbr.rel (0) target = $region41
    $region40: #{tpu_custom_call.1} parent=1 // pred_region
      %153 = dma.done [#allocation7], 32
    $region41: #{tpu_custom_call.1} parent=1 // pred_fallthru
      _
    %154 = vsyncpa [#allocation3], 1
    %155 = vsyncpa [#allocation4], 1
    %156 = vsyncpa [#allocation7], 1

</llo_original>
